<compile_context>
chip_gen: v5e
topology: v5e:2x2
jax: 0.10.0
libtpu: 0.0.40
codegen_flags: <defaults>
</compile_context>

<pallas_src>
import functools

import jax
import jax.numpy as jnp
from jax.experimental import pallas as pl
from jax.experimental.pallas import tpu as pltpu


def _stem_matmul_kernel(w_ref, x_ref, o_ref):
    # w_ref: (N, K)   x_ref: (K, tpix)   o_ref: (N, tpix)   (lane-dense output)
    o_ref[...] = jnp.dot(
        w_ref[...], x_ref[...], preferred_element_type=jnp.float32
    ).astype(o_ref.dtype)


def _pick_pixel_tile(P, batch, bytes_per_pixel, vmem_budget_bytes):
    """Pixel (lane) tiling over the flattened Ho*Wo axis.

    Prefer the full-extent slab (one contiguous DMA per image, minimal grid
    steps).  If the double-buffered blocks would exceed the VMEM budget, use
    the smallest number of balanced, 128-aligned tiles (lane-dense stores, no
    tiny ragged tails).  No shrinking for "megacore balance" on single-TC
    v5e/v6e; only for B == 1 with a large image do we force >= 2 tiles so a
    v7x megacore can split the work (cost is one extra ~0.35 us step, which is
    negligible at that size).
    """
    min_tiles = 2 if (batch == 1 and P >= 4096) else 1
    n_tiles = max(min_tiles, -(-(P * bytes_per_pixel) // vmem_budget_bytes))
    if n_tiles == 1:
        return P, 1                       # full-extent block: legal at any size
    tpix = -(-P // n_tiles)               # balanced split ...
    tpix = -(-tpix // 128) * 128          # ... rounded to lane-dense 128 multiple
    if tpix >= P:
        return P, 1
    return tpix, -(-P // tpix)


@functools.partial(
    jax.jit,
    static_argnames=("stride", "compute_dtype", "out_dtype", "vmem_budget_bytes"),
)
def tresnet_stem_forward(
    x,
    weight,
    stride,
    compute_dtype=jnp.bfloat16,
    out_dtype=None,
    vmem_budget_bytes=12 * 1024 * 1024,
):
    """TResNetStem.forward (kernel_size=1 branch).

    x:      (B, C, H, W) float32, NCHW.
    weight: (out_channel, C*stride*stride) 1x1-conv weight (bias=False);
            also accepts the raw PyTorch (out_channel, C*s*s, 1, 1) shape.
            NOTE: the K axis follows THIS module's ordering
            k = c*s*s + sh*s + sw (from its reshape/transpose chain).
    compute_dtype: streaming dtype of the activation/weight (bf16 default;
            accumulation is always f32).  Use jnp.float32 (or None) for
            bit-faithful f32 streaming.
    out_dtype: output dtype (defaults to x.dtype).
    """
    B, C, H, W = x.shape
    s = stride
    assert H % s == 0 and W % s == 0, "spatial dims must be divisible by stride"
    Ho, Wo = H // s, W // s
    P = Ho * Wo
    K = C * s * s
    N = weight.shape[0]

    if compute_dtype is None:
        compute_dtype = x.dtype
    if out_dtype is None:
        out_dtype = x.dtype

    # Space-to-depth with the module's exact channel ordering, emitted
    # channel-major with the pixel axis last (lane-dense for the kernel), cast
    # fused into the same single XLA copy so the copy WRITES compute_dtype.
    xr = (
        x.astype(compute_dtype)
        .reshape(B, C, Ho, s, Wo, s)
        .transpose(0, 1, 3, 5, 2, 4)      # (B, C, sh, sw, Ho, Wo)
        .reshape(B, K, P)                 # k = c*s*s + sh*s + sw
    )
    w = weight.reshape(N, K).astype(compute_dtype)   # (N, K) matmul LHS

    bytes_per_pixel = 2 * (
        K * jnp.dtype(compute_dtype).itemsize + N * jnp.dtype(out_dtype).itemsize
    )  # double-buffered input column + output column
    tpix, n_pt = _pick_pixel_tile(P, B, bytes_per_pixel, vmem_budget_bytes)

    y = pl.pallas_call(
        _stem_matmul_kernel,
        out_shape=jax.ShapeDtypeStruct((B, N, P), out_dtype),
        grid_spec=pltpu.PrefetchScalarGridSpec(
            num_scalar_prefetch=0,
            grid=(B, n_pt),
            in_specs=[
                pl.BlockSpec((N, K), lambda b, t: (0, 0)),          # resident weight
                pl.BlockSpec((None, K, tpix), lambda b, t: (b, 0, t)),
            ],
            out_specs=pl.BlockSpec((None, N, tpix), lambda b, t: (b, 0, t)),
        ),
        compiler_params=pltpu.CompilerParams(
            dimension_semantics=("parallel", "parallel"),
        ),
    )(w, xr)

    # Channel-major (B, N, Ho*Wo) -> NCHW (B, N, Ho, Wo): metadata-only.
    return y.reshape(B, N, Ho, Wo)


def _pytorch_forward_reference(x, weight, stride):
    """Literal jnp translation of TResNetStem.forward (pure XLA, no Pallas)."""
    B, C, H, W = x.shape
    s = stride
    Ho, Wo = H // s, W // s
    t = x.reshape(B, C, Ho, s, Wo, s)
    t = jnp.swapaxes(t, 4, 3).reshape(B, C, 1, Ho, Wo, s * s)
    t = jnp.swapaxes(t, 2, 5).reshape(B, C * s * s, Ho, Wo)
    w2d = weight.reshape(weight.shape[0], -1)
    return jnp.einsum("bkhw,ok->bohw", t, w2d)


if __name__ == "__main__":
    # Module config (kernel_size=1 branch): in_channel=4, stride=4, out_channel=32.
    B, C, H, W = 2, 4, 16, 16
    stride = 4
    out_channel = 32
    K = C * stride * stride  # 64

    k0, k1, k2, k3 = jax.random.split(jax.random.PRNGKey(0), 4)
    x = jax.random.normal(k0, (B, C, H, W), dtype=jnp.float32)
    weight = jax.random.normal(k1, (out_channel, K), dtype=jnp.float32) * (
        2.0 / K
    ) ** 0.5

    y_ref = _pytorch_forward_reference(x, weight, stride)

    # Exact f32 streaming path (module-faithful numerics).
    y_f32 = jax.block_until_ready(
        tresnet_stem_forward(x, weight, stride, compute_dtype=jnp.float32)
    )
    assert y_f32.shape == (B, out_channel, H // stride, W // stride)
    assert jnp.allclose(y_f32, y_ref, atol=1e-5, rtol=1e-5)

    # Default bf16-streaming path (f32 accumulation): input-precision loss only.
    y_bf16 = jax.block_until_ready(tresnet_stem_forward(x, weight, stride))
    assert y_bf16.shape == (B, out_channel, H // stride, W // stride)
    assert jnp.allclose(y_bf16, y_ref, atol=2e-1, rtol=1e-1)

    # Second config exercising the multi-tile + ragged-tail path (forced via a
    # tiny VMEM budget), with B == 1, C = 3 (K = 48) like the real stem.
    B2, C2, H2, W2, N2 = 1, 3, 80, 80, 64
    K2 = C2 * stride * stride  # 48
    x2 = jax.random.normal(k2, (B2, C2, H2, W2), dtype=jnp.float32)
    w2 = jax.random.normal(k3, (N2, K2), dtype=jnp.float32) * (2.0 / K2) ** 0.5
    y2 = jax.block_until_ready(
        tresnet_stem_forward(x2, w2, stride, vmem_budget_bytes=64 * 1024)
    )
    y2_ref = _pytorch_forward_reference(x2, w2, stride)
    assert y2.shape == (B2, N2, H2 // stride, W2 // stride)
    assert jnp.allclose(y2, y2_ref, atol=1e-1, rtol=1e-1)

    print("KERNEL_OK")
</pallas_src>

<mosaic_0001>
module attributes {stable_mosaic.version = 11 : i64} {
  func.func @_stem_matmul_kernel(%arg0: i32, %arg1: i32, %arg2: memref<32x64xf32, #tpu.memory_space<vmem>>, %arg3: memref<1x64x16xf32, #tpu.memory_space<vmem>>, %arg4: memref<1x32x16xf32, #tpu.memory_space<vmem>>) attributes {dimension_semantics = [#tpu.dimension_semantics<parallel>, #tpu.dimension_semantics<parallel>], iteration_bounds = array<i64: 2, 1>, scalar_prefetch = 0 : i64, scratch_operands = 0 : i64, tpu.core_type = #tpu.core_type<tc>, window_params = [{pipeline_mode = #tpu.pipeline_mode<synchronous>, transform_indices = @transform_0, window_bounds = array<i64: 32, 64>}, {transform_indices = @transform_1, window_bounds = array<i64: 1, 64, 16>}, {transform_indices = @transform_2, window_bounds = array<i64: 1, 32, 16>}]} {
    %c0 = arith.constant 0 : index
    %c0_0 = arith.constant 0 : index
    %0 = vector.load %arg2[%c0, %c0_0] : memref<32x64xf32, #tpu.memory_space<vmem>>, vector<32x64xf32>
    %c0_1 = arith.constant 0 : index
    %c0_2 = arith.constant 0 : index
    %c0_3 = arith.constant 0 : index
    %1 = vector.load %arg3[%c0_1, %c0_2, %c0_3] : memref<1x64x16xf32, #tpu.memory_space<vmem>>, vector<1x64x16xf32>
    %2 = vector.shape_cast %1 : vector<1x64x16xf32> to vector<64x16xf32>
    %cst = arith.constant dense<0.000000e+00> : vector<32x16xf32>
    %3 = tpu.matmul %0, %2, %cst {dimension_numbers = #tpu.dot_dimension_numbers<[1], [0], [0], [1], [0, 0, 1, 1], [], []>} : vector<32x64xf32>, vector<64x16xf32>, vector<32x16xf32> -> vector<32x16xf32>
    %c0_4 = arith.constant 0 : index
    %c0_5 = arith.constant 0 : index
    %c0_6 = arith.constant 0 : index
    %4 = vector.load %arg4[%c0_4, %c0_5, %c0_6] : memref<1x32x16xf32, #tpu.memory_space<vmem>>, vector<1x32x16xf32>
    %5 = vector.shape_cast %4 : vector<1x32x16xf32> to vector<32x16xf32>
    %6 = vector.shape_cast %3 : vector<32x16xf32> to vector<1x32x16xf32>
    tpu.vector_store %arg4[%c0_4, %c0_5, %c0_6], %6 {strides = array<i32>} : memref<1x32x16xf32, #tpu.memory_space<vmem>>, vector<1x32x16xf32>,
    return
  }
  func.func @transform_0(%arg0: i32, %arg1: i32) -> (i32, i32) {
    %c0_i32 = arith.constant 0 : i32
    %c0_i32_0 = arith.constant 0 : i32
    %c0_i32_1 = arith.constant 0 : i32
    return %c0_i32, %c0_i32_0 : i32, i32
  }
  func.func @transform_1(%arg0: i32, %arg1: i32) -> (i32, i32, i32) {
    %c0_i32 = arith.constant 0 : i32
    %c0_i32_0 = arith.constant 0 : i32
    return %arg0, %c0_i32, %arg1 : i32, i32, i32
  }
  func.func @transform_2(%arg0: i32, %arg1: i32) -> (i32, i32, i32) {
    %c0_i32 = arith.constant 0 : i32
    %c0_i32_0 = arith.constant 0 : i32
    return %arg0, %c0_i32, %arg1 : i32, i32, i32
  }
}

</mosaic_0001>

<llo_original>
// kernel: tresnet_stem_forward.1
$region0: #{tresnet_stem_forward.1}
  #allocation0 [shape = 'u32[]', space=smem, size = 0x4, offset = 0x4, fixed_abs, tag = 'smem constant byte address 0x4 - core index']
  #allocation1 [shape = 'u32[72,128]{1,0:T(1,128)}', space=vmem, size = 0x9000, scoped, tag = 'internal scratch']
  %s0 = inlined_call_operand.vmem [shape: f32[32,64], index: 0, kind: input, shape index: {}]
  %s1 = inlined_call_operand.vmem [shape: f32[2,64,16], index: 1, kind: input, shape index: {}]
  %s2 = inlined_call_operand.vmem [shape: f32[2,32,16], index: 2, kind: output, shape index: {}]
  %s3 = sld [smem:[#allocation0]]
  $region41: #{tresnet_stem_forward.1} parent=0
    _
  %s5 = ssub.s32 1, %s3
  %s6 = scalar_select 0, %s5, %s3
  loop: start=0, step=1, limit=4
  $region2: #{tresnet_stem_forward.1} parent=0 // loop_pre_header
    _
  $region3: #{tresnet_stem_forward.1} parent=0 // loop_header
    %s8 = sphi 0, %s12
    %p9 = scmp.ge.s32.totalorder %s8, 4
    %s15 = sphi 0, %s27
    %s16 = sphi 0, %s23
    %s17 = sphi 0, %s15
    %s18 = sphi 0, %s16
    %s19 = sphi 0, %s17
    %s20 = sphi 0, %s18
    %s28 = sphi 0, %s28
    %s30 = sphi 0, %s28
    %s31 = sphi 0, %s30
    %s45 = sphi 0, %s31
    %s53 = sphi 0, %s55
    %s56 = sphi 0, %s53
    %s57 = sphi 0, %s56
    %s73 = sphi 0, %s57
    %s81 = sphi 0, %s83
    %s84 = sphi 0, %s81
    %s85 = sphi 0, %s84
    %s101 = sphi 0, %s85
  $region4: #{tresnet_stem_forward.1} parent=0 // loop_header_branch
    %11 = sbr.rel (%p9) target = $region8
  $region5: #{tresnet_stem_forward.1} parent=0 // loop_body
    %s13 = ssub.s32 %s8, 1
    %s14 = ssub.s32 %s8, 2
    %s21 = sadd.s32 1, %s16
    %p22 = scmp.ge.s32.totalorder %s21, 1
    %s23 = scalar_select %p22, 0, %s21
    %s24 = sadd.s32 1, %s15
    %s25 = scalar_select %p22, %s24, %s15
    %p26 = scmp.ge.s32.totalorder %s25, 2
    %s27 = scalar_select %p26, 0, %s25
    %s29 = sadd.s32 %s28, 1
    %p32 = scmp.eq.s32.totalorder %s8, 1
    %p33 = scmp.ne.s32.totalorder %s28, %s30
    %p34 = scmp.eq.s32.totalorder %s8, 0
    %p35 = por %p33, %p34
    %p36 = scmp.ne.s32.totalorder %s28, %s30
    %p37 = scmp.eq.s32.totalorder %s13, 1
    %p38 = por %p36, %p37
    %p39 = scmp.ne.s32.totalorder %s30, %s31
    %p40 = scmp.eq.s32.totalorder %s13, 0
    %p41 = por %p39, %p40
    %p42 = scmp.ne.s32.totalorder %s30, %s31
    %p43 = scmp.eq.s32.totalorder %s14, 1
    %p44 = por %p42, %p43
    %p46 = scmp.ne.s32.totalorder %s31, %s45
    %p47 = scmp.eq.s32.totalorder %s14, 0
    %p48 = por %p46, %p47
    %s49 = ssub.s32 %s15, %s27
    %s50 = ssub.s32 %s16, %s23
    %s51 = sor.u32 %s49, %s50
    %p52 = scmp.eq.s32.totalorder %s51, 0
    %s54 = sadd.s32 %s53, 1
    %s55 = scalar_select %p52, %s53, %s54
    %p58 = pneg %p52
    %p59 = scmp.eq.s32.totalorder %s8, 1
    %p60 = por %p58, %p59
    %p61 = scmp.ne.s32.totalorder %s53, %s56
    %p62 = scmp.eq.s32.totalorder %s8, 0
    %p63 = por %p61, %p62
    %p64 = scmp.ne.s32.totalorder %s53, %s56
    %p65 = scmp.eq.s32.totalorder %s13, 1
    %p66 = por %p64, %p65
    %p67 = scmp.ne.s32.totalorder %s56, %s57
    %p68 = scmp.eq.s32.totalorder %s13, 0
    %p69 = por %p67, %p68
    %p70 = scmp.ne.s32.totalorder %s56, %s57
    %p71 = scmp.eq.s32.totalorder %s14, 1
    %p72 = por %p70, %p71
    %p74 = scmp.ne.s32.totalorder %s57, %s73
    %p75 = scmp.eq.s32.totalorder %s14, 0
    %p76 = por %p74, %p75
    %s77 = ssub.s32 %s15, %s27
    %s78 = ssub.s32 %s16, %s23
    %s79 = sor.u32 %s77, %s78
    %p80 = scmp.eq.s32.totalorder %s79, 0
    %s82 = sadd.s32 %s81, 1
    %s83 = scalar_select %p80, %s81, %s82
    %p86 = pneg %p80
    %p87 = scmp.eq.s32.totalorder %s8, 1
    %p88 = por %p86, %p87
    %p89 = scmp.ne.s32.totalorder %s81, %s84
    %p90 = scmp.eq.s32.totalorder %s8, 0
    %p91 = por %p89, %p90
    %p92 = scmp.ne.s32.totalorder %s81, %s84
    %p93 = scmp.eq.s32.totalorder %s13, 1
    %p94 = por %p92, %p93
    %p95 = scmp.ne.s32.totalorder %s84, %s85
    %p96 = scmp.eq.s32.totalorder %s13, 0
    %p97 = por %p95, %p96
    %p98 = scmp.ne.s32.totalorder %s84, %s85
    %p99 = scmp.eq.s32.totalorder %s14, 1
    %p100 = por %p98, %p99
    %p102 = scmp.ne.s32.totalorder %s85, %s101
    %p103 = scmp.eq.s32.totalorder %s14, 0
    %p104 = por %p102, %p103
    %p105 = scmp.le.s32.totalorder 1, %s8
    %p106 = scmp.lt.s32.totalorder %s8, 3
    %p107 = pnand %p105, %p106
    %p108 = pneg %p107
    // Predicated region
    $region9: #{tresnet_stem_forward.1} parent=5 // pred_check
      _
    $region10: #{tresnet_stem_forward.1} parent=5 // pred_check_branch
      %110 = sbr.rel (%p107) target = $region12
    $region11: #{tresnet_stem_forward.1} parent=5 // pred_region
      %s111 = ssub.s32 %s8, 1
      // Predicated region
      $region13: #{tresnet_stem_forward.1} parent=11 // pred_check
        %p112 = pneg %p41
      $region14: #{tresnet_stem_forward.1} parent=11 // pred_check_branch
        %114 = sbr.rel (%p112) target = $region16
      $region15: #{tresnet_stem_forward.1} parent=11 // pred_region
        _
      $region16: #{tresnet_stem_forward.1} parent=11 // pred_fallthru
        _
    $region12: #{tresnet_stem_forward.1} parent=5 // pred_fallthru
      _
    %p115 = scmp.lt.s32.totalorder %s8, 2
    // Predicated region
    $region17: #{tresnet_stem_forward.1} parent=5 // pred_check
      %p116 = pneg %p115
    $region18: #{tresnet_stem_forward.1} parent=5 // pred_check_branch
      %118 = sbr.rel (%p116) target = $region20
    $region19: #{tresnet_stem_forward.1} parent=5 // pred_region
      // Predicated region
      $region21: #{tresnet_stem_forward.1} parent=19 // pred_check
        %p119 = pneg %p63
      $region22: #{tresnet_stem_forward.1} parent=19 // pred_check_branch
        %121 = sbr.rel (%p119) target = $region24
      $region23: #{tresnet_stem_forward.1} parent=19 // pred_region
        %p122 = scmp.lt.s32.totalorder %s15, 1
        %s123 = scalar_select %p122, %s15, 1
        %p124 = scmp.lt.s32.totalorder %s16, 0
        %s125 = scalar_select %p124, %s16, 0
        %s126 = smul.addr %s123, 8
        %s127 = sadd.s32 %s125, %s126
        %s128 = smul.addr %s127, 8
        %s129 = scalar_lea.vmem %s1, %s128
      $region24: #{tresnet_stem_forward.1} parent=19 // pred_fallthru
        _
    $region20: #{tresnet_stem_forward.1} parent=5 // pred_fallthru
      _
    %p130 = scmp.le.s32.totalorder 1, %s8
    %p131 = scmp.lt.s32.totalorder %s8, 3
    %p132 = pnand %p130, %p131
    %p133 = pneg %p132
    // Predicated region
    $region25: #{tresnet_stem_forward.1} parent=5 // pred_check
      _
    $region26: #{tresnet_stem_forward.1} parent=5 // pred_check_branch
      %135 = sbr.rel (%p132) target = $region28
    $region27: #{tresnet_stem_forward.1} parent=5 // pred_region
      %s136 = ssub.s32 %s8, 1
      %p137 = pneg %p41
      %p138 = pneg %p38
      %p139 = scmp.lt.s32.totalorder %s17, 1
      %s140 = scalar_select %p139, %s17, 1
      %p141 = scmp.lt.s32.totalorder %s18, 0
      %s142 = scalar_select %p141, %s18, 0
      %s143 = smul.addr %s140, 8
      %s144 = sadd.s32 %s142, %s143
      %s145 = smul.addr %s144, 8
      %s146 = scalar_lea.vmem %s1, %s145
      %p147 = pneg %p69
      %p148 = pneg %p66
      %p149 = pneg %p97
      %p150 = pneg %p94
      %p151 = scmp.lt.s32.totalorder %s17, 1
      %s152 = scalar_select %p151, %s17, 1
      %p153 = scmp.lt.s32.totalorder %s18, 0
      %s154 = scalar_select %p153, %s18, 0
      %s155 = smul.addr %s152, 4
      %s156 = sadd.s32 %s154, %s155
      %s157 = smul.addr %s156, 8
      %s158 = scalar_lea.vmem %s2, %s157
      %p159 = scmp.lt.s32.totalorder %s17, 1
      %s160 = scalar_select %p159, %s17, 1
      %p161 = scmp.lt.s32.totalorder %s18, 0
      %s162 = scalar_select %p161, %s18, 0
      %s163 = smul.addr %s160, 8
      %s164 = sadd.s32 %s162, %s163
      %s165 = smul.addr %s164, 8
      %s166 = scalar_lea.vmem %s1, %s165
      %p167 = scmp.lt.s32.totalorder %s17, 1
      %s168 = scalar_select %p167, %s17, 1
      %p169 = scmp.lt.s32.totalorder %s18, 0
      %s170 = scalar_select %p169, %s18, 0
      %s171 = smul.addr %s168, 4
      %s172 = sadd.s32 %s170, %s171
      %s173 = smul.addr %s172, 8
      %s174 = scalar_lea.vmem %s2, %s173
      %v175 = vld [vmem:[%s0] sm:$0xff]
      %v176 = vld [vmem:[%s0 + $0x8] sm:$0xff]
      %v177 = vld [vmem:[%s0 + $0x10] sm:$0xff]
      %v178 = vld [vmem:[%s0 + $0x18] sm:$0xff]
      %v179 = vld [vmem:[%s166] sm:$0xff]
      %v180 = vld [vmem:[%s166 + $0x8] sm:$0xff]
      %v181 = vld [vmem:[%s166 + $0x10] sm:$0xff]
      %v182 = vld [vmem:[%s166 + $0x18] sm:$0xff]
      %v183 = vld [vmem:[%s166 + $0x20] sm:$0xff]
      %v184 = vld [vmem:[%s166 + $0x28] sm:$0xff]
      %v185 = vld [vmem:[%s166 + $0x30] sm:$0xff]
      %v186 = vld [vmem:[%s166 + $0x38] sm:$0xff]
      %vm187 = vcmask 523264
      %v189 = vsel %vm187, %v175, 0
      %v192 = vsel %vm187, %v176, 0
      %v195 = vsel %vm187, %v177, 0
      %v198 = vsel %vm187, %v178, 0
      %200 = vmatpush.msra.mxu0 0.0
      %201 = vmatpush.msra.mxu0 0.0
      %202 = vmatpush.msra.mxu0 0.0
      %203 = vmatpush.msra.mxu0 0.0
      %204 = vmatpush.msra.mxu0 0.0
      %205 = vmatpush.msra.mxu0 0.0
      %206 = vmatpush.msra.mxu0 0.0
      %207 = vmatpush.msra.mxu0 0.0
      %208 = vmatpush.msra.mxu0 %v186
      %209 = vmatpush.msra.mxu0 %v185
      %210 = vmatpush.msra.mxu0 %v184
      %211 = vmatpush.msra.mxu0 %v183
      %212 = vmatpush.msra.mxu0 %v182
      %213 = vmatpush.msra.mxu0 %v181
      %214 = vmatpush.msra.mxu0 %v180
      %215 = vmatpush.msra.mxu0 %v179
      %216 = vmatmul.f32.gmra.mxu0 %v189
      %v217 = vpop.f32.mrf.mxu0
      %v218 = vadd.f32 0.0, %v217
      %219 = vmatmul.f32.gmra.mxu0 %v192
      %v220 = vpop.f32.mrf.mxu0
      %v221 = vadd.f32 0.0, %v220
      %222 = vmatmul.f32.gmra.mxu0 %v195
      %v223 = vpop.f32.mrf.mxu0
      %v224 = vadd.f32 0.0, %v223
      %225 = vmatmul.f32.gmra.mxu0 %v198
      %v226 = vpop.f32.mrf.mxu0
      %v227 = vadd.f32 0.0, %v226
      %228 = vdwg.mxu0
      %vm229 = vcmask 130048
      %230 = vst.msk [vmem:[%s174] sm:$0xff] %vm229, %v218
      %231 = vst.msk [vmem:[%s174 + $0x8] sm:$0xff] %vm229, %v221
      %232 = vst.msk [vmem:[%s174 + $0x10] sm:$0xff] %vm229, %v224
      %233 = vst.msk [vmem:[%s174 + $0x18] sm:$0xff] %vm229, %v227
      %p234 = scmp.lt.s32.totalorder %s17, 1
      %s235 = scalar_select %p234, %s17, 1
      %p236 = scmp.lt.s32.totalorder %s18, 0
      %s237 = scalar_select %p236, %s18, 0
      %s238 = smul.addr %s235, 4
      %s239 = sadd.s32 %s237, %s238
      %s240 = smul.addr %s239, 8
      %s241 = scalar_lea.vmem %s2, %s240
      // Predicated region
      $region29: #{tresnet_stem_forward.1} parent=27 // pred_check
        %p242 = pneg %p94
      $region30: #{tresnet_stem_forward.1} parent=27 // pred_check_branch
        %244 = sbr.rel (%p242) target = $region32
      $region31: #{tresnet_stem_forward.1} parent=27 // pred_region
        _
      $region32: #{tresnet_stem_forward.1} parent=27 // pred_fallthru
        _
    $region28: #{tresnet_stem_forward.1} parent=5 // pred_fallthru
      _
    %p245 = scmp.le.s32.totalorder 2, %s8
    // Predicated region
    $region33: #{tresnet_stem_forward.1} parent=5 // pred_check
      %p246 = pneg %p245
    $region34: #{tresnet_stem_forward.1} parent=5 // pred_check_branch
      %248 = sbr.rel (%p246) target = $region36
    $region35: #{tresnet_stem_forward.1} parent=5 // pred_region
      %s249 = ssub.s32 %s8, 2
      // Predicated region
      $region37: #{tresnet_stem_forward.1} parent=35 // pred_check
        %p250 = pneg %p100
      $region38: #{tresnet_stem_forward.1} parent=35 // pred_check_branch
        %252 = sbr.rel (%p250) target = $region40
      $region39: #{tresnet_stem_forward.1} parent=35 // pred_region
        %p253 = scmp.lt.s32.totalorder %s19, 1
        %s254 = scalar_select %p253, %s19, 1
        %p255 = scmp.lt.s32.totalorder %s20, 0
        %s256 = scalar_select %p255, %s20, 0
        %s257 = smul.addr %s254, 4
        %s258 = sadd.s32 %s256, %s257
        %s259 = smul.addr %s258, 8
        %s260 = scalar_lea.vmem %s2, %s259
      $region40: #{tresnet_stem_forward.1} parent=35 // pred_fallthru
        _
    $region36: #{tresnet_stem_forward.1} parent=5 // pred_fallthru
      _
  $region6: #{tresnet_stem_forward.1} parent=0 // loop_footer
    %s12 = sadd.s32 1, %s8
  $region7: #{tresnet_stem_forward.1} parent=0 // loop_footer_branch
    %7 = sbr.rel target = $region3
  $region8: #{tresnet_stem_forward.1} parent=0 // loop_exit
    _

</llo_original>
